<compile_context>
chip_gen: v6e
topology: v6e:2x2x1
jax: 0.10.0
libtpu: 0.0.40
codegen_flags: <defaults>
</compile_context>

<pallas_src>
import functools

import jax
import jax.numpy as jnp
from jax.experimental import pallas as pl
from jax.experimental.pallas import tpu as pltpu


# ----------------------------- Pallas kernels ------------------------------

def _layer_norm_kernel(x_ref, g_ref, b_ref, o_ref, *, eps):
    """Channel LayerNorm of a (B_blk, C, N) block (stats over C per pixel)."""
    g = g_ref[0]                                         # (C, 1) f32
    b = b_ref[0]                                         # (C, 1) f32
    for bi in range(x_ref.shape[0]):                     # B_blk is small & static
        x = x_ref[bi].astype(jnp.float32)                # (C, N)  in-kernel upcast
        mean = jnp.mean(x, axis=0, keepdims=True)        # (1, N)
        var = jnp.mean((x - mean) ** 2, axis=0, keepdims=True)
        # divide once on the reduced row, broadcast a VPU multiply
        inv = pl.reciprocal(jnp.sqrt(var) + eps, approx=False)
        o_ref[bi] = ((x - mean) * inv * g + b).astype(o_ref.dtype)


def _prenorm_linattn_kernel(x_ref, g_ref, b_ref, wqv_ref, wkT_ref, wout_ref,
                            bout_ref, o_ref, *, heads, dim_head, eps):
    """Fused PreNorm(LayerNorm) + LinearAttention for a (B_blk, C, N) block.

    x_ref       : (B_blk, C, N)  native dtype, channels on sublanes, pixels on lanes
    g_ref/b_ref : (1, C, 1) f32  LayerNorm affine
    wqv_ref     : (2*hidden, C) bf16   [Wq ; Wv] 1x1 conv weights (bias=False)
    wkT_ref     : (C, hidden)   bf16   Wk^T  (so k is produced pixel-major)
    wout_ref    : (C, hidden)   bf16   1x1 out-conv weight
    bout_ref    : (1, C, 1) f32        1x1 out-conv bias
    o_ref       : (B_blk, C, N) native dtype
    """
    hidden = heads * dim_head
    g = g_ref[0]                                         # (C, 1)
    b = b_ref[0]
    bout = bout_ref[0]                                   # (C, 1)
    wqv = wqv_ref[...]                                   # (2h, C) bf16
    wkT = wkT_ref[...]                                   # (C, h)  bf16
    wout = wout_ref[...]                                 # (C, h)  bf16

    # block-diagonal head mask, hoisted out of the per-image loop
    row_h = jax.lax.broadcasted_iota(jnp.int32, (hidden, hidden), 0) // dim_head
    col_h = jax.lax.broadcasted_iota(jnp.int32, (hidden, hidden), 1) // dim_head
    head_mask = (row_h == col_h).astype(jnp.float32)     # (h, h)

    for bi in range(x_ref.shape[0]):                     # B_blk is small & static
        x = x_ref[bi].astype(jnp.float32)                # (C, N)
        n = x.shape[1]

        # ---- channel LayerNorm (f32; reciprocal on the reduced (1,N) row) ----
        mean = jnp.mean(x, axis=0, keepdims=True)
        var = jnp.mean((x - mean) ** 2, axis=0, keepdims=True)
        inv = pl.reciprocal(jnp.sqrt(var) + eps, approx=False)
        xn = (x - mean) * inv * g + b                     # (C, N) f32
        xn_b = xn.astype(jnp.bfloat16)

        # ---- q, v feature-major:  (2h, C) @ (C, N), bf16 in / f32 acc ----
        qv = jnp.dot(wqv, xn_b, preferred_element_type=jnp.float32)   # (2h, N)
        q = qv[:hidden]                                   # (h, N)
        v = qv[hidden:]                                   # (h, N)

        # ---- k pixel-major via ONE small transpose (no per-head transposes) ----
        xnT_b = xn.T.astype(jnp.bfloat16)                 # (N, C)
        kT = jnp.dot(xnT_b, wkT, preferred_element_type=jnp.float32)  # (N, h)

        # ---- softmax(k) over the pixel axis (f32) ----
        kT = kT - jnp.max(kT, axis=0, keepdims=True)
        kT = jnp.exp(kT)
        ksum = jnp.sum(kT, axis=0, keepdims=True)         # (1, h)
        kT = kT * pl.reciprocal(ksum, approx=True)

        # ---- linear attention as two dense matmuls + block-diag head mask ----
        # ctx[i, j] = sum_n v[i, n] * k[j, n]; only same-head (i, j) blocks used.
        ctx = jnp.dot(v.astype(jnp.bfloat16), kT.astype(jnp.bfloat16),
                      preferred_element_type=jnp.float32)              # (h, h)
        ctx = ctx * head_mask
        out = jnp.dot(ctx.astype(jnp.bfloat16), q.astype(jnp.bfloat16),
                      preferred_element_type=jnp.float32)              # (h, N)

        # ---- to_out 1x1 conv, f32 bias epilogue, lane-dense store ----
        y = jnp.dot(wout, out.astype(jnp.bfloat16),
                    preferred_element_type=jnp.float32) + bout          # (C, N)
        o_ref[bi] = y.astype(o_ref.dtype)


# ------------------------------- wrappers -----------------------------------

def _pick_batch_block(B, C, N, itemsize, max_bytes=4 << 20):
    """Largest divisor of B keeping >=2 grid steps (v7x megacore) and a small block."""
    best = 1
    for bb in range(1, B + 1):
        if B % bb:
            continue
        if B >= 2 and (B // bb) < 2:
            continue
        if bb * C * N * itemsize > max_bytes:
            continue
        best = bb
    return best


def layer_norm_pallas(x, g, b, eps=1e-5, batch_block=None):
    """PyTorch-style channel LayerNorm on an NCHW tensor (Pallas kernel)."""
    B, C, H, W = x.shape
    N = H * W
    xr = x.reshape(B, C, N)                               # free reshape, native dtype
    g2 = g.reshape(1, C, 1).astype(jnp.float32)
    b2 = b.reshape(1, C, 1).astype(jnp.float32)
    if batch_block is None:
        batch_block = _pick_batch_block(B, C, N, x.dtype.itemsize)
    out = pl.pallas_call(
        functools.partial(_layer_norm_kernel, eps=eps),
        out_shape=jax.ShapeDtypeStruct((B, C, N), x.dtype),
        grid=(B // batch_block,),
        in_specs=[pl.BlockSpec((batch_block, C, N), lambda i: (i, 0, 0)),
                  pl.BlockSpec((1, C, 1), lambda i: (0, 0, 0)),
                  pl.BlockSpec((1, C, 1), lambda i: (0, 0, 0))],
        out_specs=pl.BlockSpec((batch_block, C, N), lambda i: (i, 0, 0)),
        compiler_params=pltpu.CompilerParams(
            dimension_semantics=("parallel",),
            vmem_limit_bytes=32 * 1024 * 1024),
    )(xr, g2, b2)
    return out.reshape(B, C, H, W)


def pre_norm(x, norm_g, norm_b, fn, eps=1e-5):
    """Generic PreNorm: fn(LayerNorm(x)) for an arbitrary JAX callable fn."""
    # TODO(synk): arbitrary `fn` runs as plain JAX after the Pallas LayerNorm;
    # use pre_norm_linear_attention for the fully fused UNet attention path.
    return fn(layer_norm_pallas(x, norm_g, norm_b, eps))


def pre_norm_linear_attention(x, params, *, heads=4, dim_head=32, eps=1e-5,
                              batch_block=None):
    """Fused PreNorm + LinearAttention (the `fn` PreNorm wraps in the UNet)."""
    B, C, H, W = x.shape
    N = H * W
    hidden = heads * dim_head
    xr = x.reshape(B, C, N)                               # native dtype, no copy
    g2 = params['norm_g'].reshape(1, C, 1).astype(jnp.float32)
    b2 = params['norm_b'].reshape(1, C, 1).astype(jnp.float32)
    wqkv = params['to_qkv_w'].reshape(3 * hidden, C)
    # split once in the wrapper: [Wq ; Wv] feature-major, Wk transposed (pixel-major k)
    wqv = jnp.concatenate([wqkv[:hidden], wqkv[2 * hidden:]], axis=0).astype(jnp.bfloat16)
    wkT = wqkv[hidden:2 * hidden].T.astype(jnp.bfloat16)
    wout = params['to_out_w'].reshape(C, hidden).astype(jnp.bfloat16)
    bout = params['to_out_b'].reshape(1, C, 1).astype(jnp.float32)
    if batch_block is None:
        batch_block = _pick_batch_block(B, C, N, x.dtype.itemsize)
    kernel = functools.partial(_prenorm_linattn_kernel, heads=heads,
                               dim_head=dim_head, eps=eps)
    out = pl.pallas_call(
        kernel,
        out_shape=jax.ShapeDtypeStruct((B, C, N), x.dtype),
        grid=(B // batch_block,),
        in_specs=[pl.BlockSpec((batch_block, C, N), lambda i: (i, 0, 0)),
                  pl.BlockSpec((1, C, 1), lambda i: (0, 0, 0)),
                  pl.BlockSpec((1, C, 1), lambda i: (0, 0, 0)),
                  pl.BlockSpec((2 * hidden, C), lambda i: (0, 0)),
                  pl.BlockSpec((C, hidden), lambda i: (0, 0)),
                  pl.BlockSpec((C, hidden), lambda i: (0, 0)),
                  pl.BlockSpec((1, C, 1), lambda i: (0, 0, 0))],
        out_specs=pl.BlockSpec((batch_block, C, N), lambda i: (i, 0, 0)),
        compiler_params=pltpu.CompilerParams(
            dimension_semantics=("parallel",),
            vmem_limit_bytes=32 * 1024 * 1024),
    )(xr, g2, b2, wqv, wkT, wout, bout)
    return out.reshape(B, C, H, W)


# ----------------------------- plain-JAX refs --------------------------------

def _reference_layer_norm(x, g, b, eps=1e-5):
    mean = x.mean(axis=1, keepdims=True)
    var = ((x - mean) ** 2).mean(axis=1, keepdims=True)
    return (x - mean) / (jnp.sqrt(var) + eps) * g + b


def _reference_prenorm_linattn(x, params, heads=4, dim_head=32, eps=1e-5):
    B, C, H, W = x.shape
    xn = _reference_layer_norm(x, params['norm_g'], params['norm_b'], eps)
    hidden = heads * dim_head
    wqkv = params['to_qkv_w'].reshape(3 * hidden, C)
    qkv = jnp.einsum('oc,bchw->bohw', wqkv, xn)
    qkv = qkv.reshape(B, 3, heads, dim_head, H * W)
    q, k, v = qkv[:, 0], qkv[:, 1], qkv[:, 2]
    k = jax.nn.softmax(k, axis=-1)
    context = jnp.einsum('bhdn,bhen->bhde', k, v)
    out = jnp.einsum('bhde,bhdn->bhen', context, q)
    out = out.reshape(B, hidden, H, W)
    wout = params['to_out_w'].reshape(C, hidden)
    return (jnp.einsum('oc,bchw->bohw', wout, out)
            + params['to_out_b'][None, :, None, None])


# ----------------------------------- main ------------------------------------

if __name__ == "__main__":
    B, C, H, W = 4, 32, 16, 16          # dim = 32, 16x16 feature map
    HEADS, DIM_HEAD = 4, 32
    HIDDEN = HEADS * DIM_HEAD

    key = jax.random.PRNGKey(0)
    kx, kq, ko, kb = jax.random.split(key, 4)
    x = jax.random.normal(kx, (B, C, H, W), jnp.float32)

    bound_qkv = 1.0 / (C ** 0.5)
    bound_out = 1.0 / (HIDDEN ** 0.5)
    params = {
        'norm_g': jnp.ones((1, C, 1, 1), jnp.float32),
        'norm_b': jnp.zeros((1, C, 1, 1), jnp.float32),
        'to_qkv_w': jax.random.uniform(kq, (3 * HIDDEN, C, 1, 1), jnp.float32,
                                       -bound_qkv, bound_qkv),
        'to_out_w': jax.random.uniform(ko, (C, HIDDEN, 1, 1), jnp.float32,
                                       -bound_out, bound_out),
        'to_out_b': jax.random.uniform(kb, (C,), jnp.float32,
                                       -bound_out, bound_out),
    }

    # 1) Generic PreNorm path (standalone Pallas LayerNorm kernel, fn=identity).
    ln_fn = jax.jit(lambda xx: pre_norm(xx, params['norm_g'],
                                        params['norm_b'], fn=lambda z: z))
    y_ln = jax.block_until_ready(ln_fn(x))
    ref_ln = _reference_layer_norm(x, params['norm_g'], params['norm_b'])
    assert y_ln.shape == (B, C, H, W), y_ln.shape
    assert float(jnp.max(jnp.abs(y_ln - ref_ln))) < 1e-4

    # 2) Fused PreNorm + LinearAttention (the fn PreNorm wraps in the UNet).
    fused = jax.jit(functools.partial(pre_norm_linear_attention,
                                      heads=HEADS, dim_head=DIM_HEAD))
    y = jax.block_until_ready(fused(x, params))
    ref = _reference_prenorm_linattn(x, params, HEADS, DIM_HEAD)
    assert y.shape == (B, C, H, W), y.shape
    assert bool(jnp.all(jnp.isfinite(y)))
    # bf16 MXU operands with f32 accumulation -> loose tolerance vs f32 ref.
    assert float(jnp.max(jnp.abs(y - ref))) < 0.3

    print("KERNEL_OK")
</pallas_src>

<mosaic_0001>
module attributes {stable_mosaic.version = 11 : i64} {
  func.func @_layer_norm_kernel(%arg0: i32, %arg1: memref<2x32x256xf32, #tpu.memory_space<vmem>>, %arg2: memref<1x32x1xf32, #tpu.memory_space<vmem>>, %arg3: memref<1x32x1xf32, #tpu.memory_space<vmem>>, %arg4: memref<2x32x256xf32, #tpu.memory_space<vmem>>) attributes {dimension_semantics = [#tpu.dimension_semantics<parallel>], iteration_bounds = array<i64: 2>, scalar_prefetch = 0 : i64, scratch_operands = 0 : i64, tpu.core_type = #tpu.core_type<tc>, window_params = [{transform_indices = @transform_0, window_bounds = array<i64: 2, 32, 256>}, {pipeline_mode = #tpu.pipeline_mode<synchronous>, transform_indices = @transform_1, window_bounds = array<i64: 1, 32, 1>}, {pipeline_mode = #tpu.pipeline_mode<synchronous>, transform_indices = @transform_2, window_bounds = array<i64: 1, 32, 1>}, {transform_indices = @transform_3, window_bounds = array<i64: 2, 32, 256>}]} {
    %c0 = arith.constant 0 : index
    %c0_0 = arith.constant 0 : index
    %c0_1 = arith.constant 0 : index
    %0 = vector.load %arg2[%c0, %c0_0, %c0_1] : memref<1x32x1xf32, #tpu.memory_space<vmem>>, vector<1x32x1xf32>
    %1 = vector.shape_cast %0 : vector<1x32x1xf32> to vector<32x1xf32>
    %c0_2 = arith.constant 0 : index
    %c0_3 = arith.constant 0 : index
    %c0_4 = arith.constant 0 : index
    %2 = vector.load %arg3[%c0_2, %c0_3, %c0_4] : memref<1x32x1xf32, #tpu.memory_space<vmem>>, vector<1x32x1xf32>
    %3 = vector.shape_cast %2 : vector<1x32x1xf32> to vector<32x1xf32>
    %c0_5 = arith.constant 0 : index
    %c0_6 = arith.constant 0 : index
    %c0_7 = arith.constant 0 : index
    %4 = vector.load %arg1[%c0_5, %c0_6, %c0_7] : memref<2x32x256xf32, #tpu.memory_space<vmem>>, vector<1x32x256xf32>
    %5 = vector.shape_cast %4 : vector<1x32x256xf32> to vector<32x256xf32>
    %cst = arith.constant dense<0.000000e+00> : vector<256xf32>
    %6 = vector.multi_reduction <add>, %5, %cst [0] : vector<32x256xf32> to vector<256xf32>
    %7 = vector.shape_cast %6 : vector<256xf32> to vector<1x256xf32>
    %cst_8 = arith.constant 3.200000e+01 : f32
    %8 = vector.broadcast %cst_8 : f32 to vector<1x256xf32>
    %9 = arith.divf %7, %8 : vector<1x256xf32>
    %10 = vector.broadcast %9 : vector<1x256xf32> to vector<32x256xf32>
    %11 = arith.subf %5, %10 : vector<32x256xf32>
    %12 = arith.mulf %11, %11 : vector<32x256xf32>
    %cst_9 = arith.constant dense<0.000000e+00> : vector<256xf32>
    %13 = vector.multi_reduction <add>, %12, %cst_9 [0] : vector<32x256xf32> to vector<256xf32>
    %14 = vector.shape_cast %13 : vector<256xf32> to vector<1x256xf32>
    %cst_10 = arith.constant 3.200000e+01 : f32
    %15 = vector.broadcast %cst_10 : f32 to vector<1x256xf32>
    %16 = arith.divf %14, %15 : vector<1x256xf32>
    %17 = math.sqrt %16 : vector<1x256xf32>
    %cst_11 = arith.constant 9.99999974E-6 : f32
    %18 = vector.broadcast %cst_11 : f32 to vector<1x256xf32>
    %19 = arith.addf %17, %18 : vector<1x256xf32>
    %20 = tpu.reciprocal %19 : vector<1x256xf32> -> vector<1x256xf32>
    %21 = vector.broadcast %9 : vector<1x256xf32> to vector<32x256xf32>
    %22 = arith.subf %5, %21 : vector<32x256xf32>
    %23 = vector.broadcast %20 : vector<1x256xf32> to vector<32x256xf32>
    %24 = arith.mulf %22, %23 : vector<32x256xf32>
    %25 = vector.broadcast %1 : vector<32x1xf32> to vector<32x256xf32>
    %26 = arith.mulf %24, %25 : vector<32x256xf32>
    %27 = vector.broadcast %3 : vector<32x1xf32> to vector<32x256xf32>
    %28 = arith.addf %26, %27 : vector<32x256xf32>
    %c0_12 = arith.constant 0 : index
    %c0_13 = arith.constant 0 : index
    %c0_14 = arith.constant 0 : index
    %29 = vector.load %arg4[%c0_12, %c0_13, %c0_14] : memref<2x32x256xf32, #tpu.memory_space<vmem>>, vector<1x32x256xf32>
    %30 = vector.shape_cast %29 : vector<1x32x256xf32> to vector<32x256xf32>
    %31 = vector.shape_cast %28 : vector<32x256xf32> to vector<1x32x256xf32>
    tpu.vector_store %arg4[%c0_12, %c0_13, %c0_14], %31 {strides = array<i32>} : memref<2x32x256xf32, #tpu.memory_space<vmem>>, vector<1x32x256xf32>,
    %c1 = arith.constant 1 : index
    %c0_15 = arith.constant 0 : index
    %c0_16 = arith.constant 0 : index
    %32 = vector.load %arg1[%c1, %c0_15, %c0_16] : memref<2x32x256xf32, #tpu.memory_space<vmem>>, vector<1x32x256xf32>
    %33 = vector.shape_cast %32 : vector<1x32x256xf32> to vector<32x256xf32>
    %cst_17 = arith.constant dense<0.000000e+00> : vector<256xf32>
    %34 = vector.multi_reduction <add>, %33, %cst_17 [0] : vector<32x256xf32> to vector<256xf32>
    %35 = vector.shape_cast %34 : vector<256xf32> to vector<1x256xf32>
    %cst_18 = arith.constant 3.200000e+01 : f32
    %36 = vector.broadcast %cst_18 : f32 to vector<1x256xf32>
    %37 = arith.divf %35, %36 : vector<1x256xf32>
    %38 = vector.broadcast %37 : vector<1x256xf32> to vector<32x256xf32>
    %39 = arith.subf %33, %38 : vector<32x256xf32>
    %40 = arith.mulf %39, %39 : vector<32x256xf32>
    %cst_19 = arith.constant dense<0.000000e+00> : vector<256xf32>
    %41 = vector.multi_reduction <add>, %40, %cst_19 [0] : vector<32x256xf32> to vector<256xf32>
    %42 = vector.shape_cast %41 : vector<256xf32> to vector<1x256xf32>
    %cst_20 = arith.constant 3.200000e+01 : f32
    %43 = vector.broadcast %cst_20 : f32 to vector<1x256xf32>
    %44 = arith.divf %42, %43 : vector<1x256xf32>
    %45 = math.sqrt %44 : vector<1x256xf32>
    %cst_21 = arith.constant 9.99999974E-6 : f32
    %46 = vector.broadcast %cst_21 : f32 to vector<1x256xf32>
    %47 = arith.addf %45, %46 : vector<1x256xf32>
    %48 = tpu.reciprocal %47 : vector<1x256xf32> -> vector<1x256xf32>
    %49 = vector.broadcast %37 : vector<1x256xf32> to vector<32x256xf32>
    %50 = arith.subf %33, %49 : vector<32x256xf32>
    %51 = vector.broadcast %48 : vector<1x256xf32> to vector<32x256xf32>
    %52 = arith.mulf %50, %51 : vector<32x256xf32>
    %53 = vector.broadcast %1 : vector<32x1xf32> to vector<32x256xf32>
    %54 = arith.mulf %52, %53 : vector<32x256xf32>
    %55 = vector.broadcast %3 : vector<32x1xf32> to vector<32x256xf32>
    %56 = arith.addf %54, %55 : vector<32x256xf32>
    %c1_22 = arith.constant 1 : index
    %c0_23 = arith.constant 0 : index
    %c0_24 = arith.constant 0 : index
    %57 = vector.load %arg4[%c1_22, %c0_23, %c0_24] : memref<2x32x256xf32, #tpu.memory_space<vmem>>, vector<1x32x256xf32>
    %58 = vector.shape_cast %57 : vector<1x32x256xf32> to vector<32x256xf32>
    %59 = vector.shape_cast %56 : vector<32x256xf32> to vector<1x32x256xf32>
    tpu.vector_store %arg4[%c1_22, %c0_23, %c0_24], %59 {strides = array<i32>} : memref<2x32x256xf32, #tpu.memory_space<vmem>>, vector<1x32x256xf32>,
    return
  }
  func.func @transform_0(%arg0: i32) -> (i32, i32, i32) {
    %c0_i32 = arith.constant 0 : i32
    %c0_i32_0 = arith.constant 0 : i32
    %c0_i32_1 = arith.constant 0 : i32
    return %arg0, %c0_i32, %c0_i32_0 : i32, i32, i32
  }
  func.func @transform_1(%arg0: i32) -> (i32, i32, i32) {
    %c0_i32 = arith.constant 0 : i32
    %c0_i32_0 = arith.constant 0 : i32
    %c0_i32_1 = arith.constant 0 : i32
    %c0_i32_2 = arith.constant 0 : i32
    return %c0_i32, %c0_i32_0, %c0_i32_1 : i32, i32, i32
  }
  func.func @transform_2(%arg0: i32) -> (i32, i32, i32) {
    %c0_i32 = arith.constant 0 : i32
    %c0_i32_0 = arith.constant 0 : i32
    %c0_i32_1 = arith.constant 0 : i32
    %c0_i32_2 = arith.constant 0 : i32
    return %c0_i32, %c0_i32_0, %c0_i32_1 : i32, i32, i32
  }
  func.func @transform_3(%arg0: i32) -> (i32, i32, i32) {
    %c0_i32 = arith.constant 0 : i32
    %c0_i32_0 = arith.constant 0 : i32
    %c0_i32_1 = arith.constant 0 : i32
    return %arg0, %c0_i32, %c0_i32_0 : i32, i32, i32
  }
}

</mosaic_0001>

<llo_original>
// kernel: _lambda_.1
$region0: #{_lambda_.1}
  #allocation0 [shape = 'u32[]', space=smem, size = 0x4, offset = 0x4, fixed_abs, tag = 'smem constant byte address 0x4 - core index']
  #allocation1 [shape = 'u32[144,128]{1,0:T(1,128)}', space=vmem, size = 0x12000, scoped, tag = 'internal scratch']
  %s0 = inlined_call_operand.vmem [shape: f32[4,32,256], index: 0, kind: input, shape index: {}]
  %s1 = inlined_call_operand.vmem [shape: f32[1,32,1], index: 1, kind: input, shape index: {}]
  %s2 = inlined_call_operand.vmem [shape: f32[1,32,1], index: 2, kind: input, shape index: {}]
  %s3 = inlined_call_operand.vmem [shape: f32[4,32,256], index: 3, kind: output, shape index: {}]
  %s4 = sld [smem:[#allocation0]]
  $region45: #{_lambda_.1} parent=0
    _
  %s6 = ssub.s32 1, %s4
  %s7 = scalar_select 0, %s6, %s4
  loop: start=0, step=1, limit=4
  $region2: #{_lambda_.1} parent=0 // loop_pre_header
    _
  $region3: #{_lambda_.1} parent=0 // loop_header
    %s9 = sphi 0, %s13
    %p10 = scmp.ge.s32.totalorder %s9, 4
    %s19 = sphi 0, %s21
    %s22 = sphi 0, %s19
    %s23 = sphi 0, %s22
    %s39 = sphi 0, %s23
    %s43 = sphi 0, %s43
    %s45 = sphi 0, %s43
    %s46 = sphi 0, %s45
    %s60 = sphi 0, %s46
    %s64 = sphi 0, %s64
    %s66 = sphi 0, %s64
    %s67 = sphi 0, %s66
    %s81 = sphi 0, %s67
    %s87 = sphi 0, %s89
    %s90 = sphi 0, %s87
    %s91 = sphi 0, %s90
    %s107 = sphi 0, %s91
  $region4: #{_lambda_.1} parent=0 // loop_header_branch
    %12 = sbr.rel (%p10) target = $region8
  $region5: #{_lambda_.1} parent=0 // loop_body
    %s14 = ssub.s32 %s9, 1
    %s15 = ssub.s32 %s9, 2
    %s16 = sadd.s32 %s9, 1
    %s17 = ssub.s32 %s9, %s16
    %p18 = scmp.eq.s32.totalorder %s17, 0
    %s20 = sadd.s32 %s19, 1
    %s21 = scalar_select %p18, %s19, %s20
    %p24 = pneg %p18
    %p25 = scmp.eq.s32.totalorder %s9, 1
    %p26 = por %p24, %p25
    %p27 = scmp.ne.s32.totalorder %s19, %s22
    %p28 = scmp.eq.s32.totalorder %s9, 0
    %p29 = por %p27, %p28
    %p30 = scmp.ne.s32.totalorder %s19, %s22
    %p31 = scmp.eq.s32.totalorder %s14, 1
    %p32 = por %p30, %p31
    %p33 = scmp.ne.s32.totalorder %s22, %s23
    %p34 = scmp.eq.s32.totalorder %s14, 0
    %p35 = por %p33, %p34
    %p36 = scmp.ne.s32.totalorder %s22, %s23
    %p37 = scmp.eq.s32.totalorder %s15, 1
    %p38 = por %p36, %p37
    %p40 = scmp.ne.s32.totalorder %s23, %s39
    %p41 = scmp.eq.s32.totalorder %s15, 0
    %p42 = por %p40, %p41
    %s44 = sadd.s32 %s43, 1
    %p47 = scmp.eq.s32.totalorder %s9, 1
    %p48 = scmp.ne.s32.totalorder %s43, %s45
    %p49 = scmp.eq.s32.totalorder %s9, 0
    %p50 = por %p48, %p49
    %p51 = scmp.ne.s32.totalorder %s43, %s45
    %p52 = scmp.eq.s32.totalorder %s14, 1
    %p53 = por %p51, %p52
    %p54 = scmp.ne.s32.totalorder %s45, %s46
    %p55 = scmp.eq.s32.totalorder %s14, 0
    %p56 = por %p54, %p55
    %p57 = scmp.ne.s32.totalorder %s45, %s46
    %p58 = scmp.eq.s32.totalorder %s15, 1
    %p59 = por %p57, %p58
    %p61 = scmp.ne.s32.totalorder %s46, %s60
    %p62 = scmp.eq.s32.totalorder %s15, 0
    %p63 = por %p61, %p62
    %s65 = sadd.s32 %s64, 1
    %p68 = scmp.eq.s32.totalorder %s9, 1
    %p69 = scmp.ne.s32.totalorder %s64, %s66
    %p70 = scmp.eq.s32.totalorder %s9, 0
    %p71 = por %p69, %p70
    %p72 = scmp.ne.s32.totalorder %s64, %s66
    %p73 = scmp.eq.s32.totalorder %s14, 1
    %p74 = por %p72, %p73
    %p75 = scmp.ne.s32.totalorder %s66, %s67
    %p76 = scmp.eq.s32.totalorder %s14, 0
    %p77 = por %p75, %p76
    %p78 = scmp.ne.s32.totalorder %s66, %s67
    %p79 = scmp.eq.s32.totalorder %s15, 1
    %p80 = por %p78, %p79
    %p82 = scmp.ne.s32.totalorder %s67, %s81
    %p83 = scmp.eq.s32.totalorder %s15, 0
    %p84 = por %p82, %p83
    %s85 = ssub.s32 %s9, %s16
    %p86 = scmp.eq.s32.totalorder %s85, 0
    %s88 = sadd.s32 %s87, 1
    %s89 = scalar_select %p86, %s87, %s88
    %p92 = pneg %p86
    %p93 = scmp.eq.s32.totalorder %s9, 1
    %p94 = por %p92, %p93
    %p95 = scmp.ne.s32.totalorder %s87, %s90
    %p96 = scmp.eq.s32.totalorder %s9, 0
    %p97 = por %p95, %p96
    %p98 = scmp.ne.s32.totalorder %s87, %s90
    %p99 = scmp.eq.s32.totalorder %s14, 1
    %p100 = por %p98, %p99
    %p101 = scmp.ne.s32.totalorder %s90, %s91
    %p102 = scmp.eq.s32.totalorder %s14, 0
    %p103 = por %p101, %p102
    %p104 = scmp.ne.s32.totalorder %s90, %s91
    %p105 = scmp.eq.s32.totalorder %s15, 1
    %p106 = por %p104, %p105
    %p108 = scmp.ne.s32.totalorder %s91, %s107
    %p109 = scmp.eq.s32.totalorder %s15, 0
    %p110 = por %p108, %p109
    %p111 = scmp.le.s32.totalorder 1, %s9
    %p112 = scmp.lt.s32.totalorder %s9, 3
    %p113 = pnand %p111, %p112
    %p114 = pneg %p113
    // Predicated region
    $region9: #{_lambda_.1} parent=5 // pred_check
      _
    $region10: #{_lambda_.1} parent=5 // pred_check_branch
      %116 = sbr.rel (%p113) target = $region12
    $region11: #{_lambda_.1} parent=5 // pred_region
      %s117 = ssub.s32 %s9, 1
      // Predicated region
      $region13: #{_lambda_.1} parent=11 // pred_check
        %p118 = pneg %p56
      $region14: #{_lambda_.1} parent=11 // pred_check_branch
        %120 = sbr.rel (%p118) target = $region16
      $region15: #{_lambda_.1} parent=11 // pred_region
        _
      $region16: #{_lambda_.1} parent=11 // pred_fallthru
        _
      // Predicated region
      $region17: #{_lambda_.1} parent=11 // pred_check
        %p121 = pneg %p77
      $region18: #{_lambda_.1} parent=11 // pred_check_branch
        %123 = sbr.rel (%p121) target = $region20
      $region19: #{_lambda_.1} parent=11 // pred_region
        _
      $region20: #{_lambda_.1} parent=11 // pred_fallthru
        _
    $region12: #{_lambda_.1} parent=5 // pred_fallthru
      _
    %p124 = scmp.lt.s32.totalorder %s9, 2
    // Predicated region
    $region21: #{_lambda_.1} parent=5 // pred_check
      %p125 = pneg %p124
    $region22: #{_lambda_.1} parent=5 // pred_check_branch
      %127 = sbr.rel (%p125) target = $region24
    $region23: #{_lambda_.1} parent=5 // pred_region
      // Predicated region
      $region25: #{_lambda_.1} parent=23 // pred_check
        %p128 = pneg %p29
      $region26: #{_lambda_.1} parent=23 // pred_check_branch
        %130 = sbr.rel (%p128) target = $region28
      $region27: #{_lambda_.1} parent=23 // pred_region
        %s131 = smul.u32 2, %s9
        %p132 = scmp.lt.s32.totalorder %s131, 3
        %s133 = scalar_select %p132, %s131, 3
        %s134 = smul.addr %s133, 8
        %s135 = smul.addr %s134, 8
        %s136 = scalar_lea.vmem %s0, %s135
        %s137 = smul.u32 2, %s9
      $region28: #{_lambda_.1} parent=23 // pred_fallthru
        _
    $region24: #{_lambda_.1} parent=5 // pred_fallthru
      _
    %p138 = scmp.le.s32.totalorder 1, %s9
    %p139 = scmp.lt.s32.totalorder %s9, 3
    %p140 = pnand %p138, %p139
    %p141 = pneg %p140
    // Predicated region
    $region29: #{_lambda_.1} parent=5 // pred_check
      _
    $region30: #{_lambda_.1} parent=5 // pred_check_branch
      %143 = sbr.rel (%p140) target = $region32
    $region31: #{_lambda_.1} parent=5 // pred_region
      %s144 = ssub.s32 %s9, 1
      %s145 = smul.u32 2, %s14
      %p146 = scmp.lt.s32.totalorder %s145, 3
      %s147 = scalar_select %p146, %s145, 3
      %s148 = smul.addr %s147, 8
      %s149 = smul.addr %s148, 8
      %s150 = scalar_lea.vmem %s0, %s149
      %p151 = pneg %p35
      %p152 = pneg %p32
      %p153 = pneg %p56
      %p154 = pneg %p53
      %p155 = pneg %p77
      %p156 = pneg %p74
      %p157 = pneg %p103
      %p158 = pneg %p100
      %s159 = smul.u32 2, %s14
      %p160 = scmp.lt.s32.totalorder %s159, 3
      %s161 = scalar_select %p160, %s159, 3
      %s162 = smul.addr %s161, 8
      %s163 = smul.addr %s162, 8
      %s164 = scalar_lea.vmem %s3, %s163
      %s165 = smul.u32 2, %s14
      %p166 = scmp.lt.s32.totalorder %s165, 3
      %s167 = scalar_select %p166, %s165, 3
      %s168 = smul.addr %s167, 8
      %s169 = smul.addr %s168, 8
      %s170 = scalar_lea.vmem %s0, %s169
      %s171 = smul.u32 2, %s14
      %s172 = smul.u32 2, %s14
      %p173 = scmp.lt.s32.totalorder %s172, 3
      %s174 = scalar_select %p173, %s172, 3
      %s175 = smul.addr %s174, 8
      %s176 = smul.addr %s175, 8
      %s177 = scalar_lea.vmem %s3, %s176
      %s178 = smul.u32 2, %s14
      %v179 = vld [vmem:[%s1] sm:$0xff]
      %v180 = vld [vmem:[%s1 + $0x8] sm:$0xff]
      %v181 = vld [vmem:[%s1 + $0x10] sm:$0xff]
      %v182 = vld [vmem:[%s1 + $0x18] sm:$0xff]
      %v183 = vld [vmem:[%s2] sm:$0xff]
      %v184 = vld [vmem:[%s2 + $0x8] sm:$0xff]
      %v185 = vld [vmem:[%s2 + $0x10] sm:$0xff]
      %v186 = vld [vmem:[%s2 + $0x18] sm:$0xff]
      %v187 = vld [vmem:[%s170] sm:$0xff]
      %v188 = vld [vmem:[%s170 + $0x8] sm:$0xff]
      %v189 = vld [vmem:[%s170 + $0x10] sm:$0xff]
      %v190 = vld [vmem:[%s170 + $0x18] sm:$0xff]
      %v191 = vld [vmem:[%s170 + $0x20] sm:$0xff]
      %v192 = vld [vmem:[%s170 + $0x28] sm:$0xff]
      %v193 = vld [vmem:[%s170 + $0x30] sm:$0xff]
      %v194 = vld [vmem:[%s170 + $0x38] sm:$0xff]
      %v195 = vadd.f32 %v187, %v189
      %v196 = vadd.f32 %v195, %v191
      %v197 = vadd.f32 %v196, %v193
      %v198 = vrot.slane %v197, 4
      %v199 = vadd.f32 %v197, %v198
      %v200 = vrot.slane %v199, 2
      %v201 = vadd.f32 %v199, %v200
      %v202 = vrot.slane %v201, 1
      %v203 = vadd.f32 %v201, %v202
      %v204 = vadd.f32 %v188, %v190
      %v205 = vadd.f32 %v204, %v192
      %v206 = vadd.f32 %v205, %v194
      %v207 = vrot.slane %v206, 4
      %v208 = vadd.f32 %v206, %v207
      %v209 = vrot.slane %v208, 2
      %v210 = vadd.f32 %v208, %v209
      %v211 = vrot.slane %v210, 1
      %v212 = vadd.f32 %v210, %v211
      %v213 = vrcp.pop 32.0
      %v214 = vmul.f32 %v203, %v213
      %v215 = vmul.f32 %v212, %v213
      %v216 = vsub.f32 %v187, %v214
      %v217 = vsub.f32 %v188, %v215
      %v218 = vsub.f32 %v189, %v214
      %v219 = vsub.f32 %v190, %v215
      %v220 = vsub.f32 %v191, %v214
      %v221 = vsub.f32 %v192, %v215
      %v222 = vsub.f32 %v193, %v214
      %v223 = vsub.f32 %v194, %v215
      %v224 = vmul.f32 %v216, %v216
      %v225 = vmul.f32 %v217, %v217
      %v226 = vmul.f32 %v218, %v218
      %v227 = vmul.f32 %v219, %v219
      %v228 = vmul.f32 %v220, %v220
      %v229 = vmul.f32 %v221, %v221
      %v230 = vmul.f32 %v222, %v222
      %v231 = vmul.f32 %v223, %v223
      %v232 = vadd.f32 %v224, %v226
      %v233 = vadd.f32 %v232, %v228
      %v234 = vadd.f32 %v233, %v230
      %v235 = vrot.slane %v234, 4
      %v236 = vadd.f32 %v234, %v235
      %v237 = vrot.slane %v236, 2
      %v238 = vadd.f32 %v236, %v237
      %v239 = vrot.slane %v238, 1
      %v240 = vadd.f32 %v238, %v239
      %v241 = vadd.f32 %v225, %v227
      %v242 = vadd.f32 %v241, %v229
      %v243 = vadd.f32 %v242, %v231
      %v244 = vrot.slane %v243, 4
      %v245 = vadd.f32 %v243, %v244
      %v246 = vrot.slane %v245, 2
      %v247 = vadd.f32 %v245, %v246
      %v248 = vrot.slane %v247, 1
      %v249 = vadd.f32 %v247, %v248
      %v250 = vmul.f32 %v240, %v213
      %v251 = vmul.f32 %v249, %v213
      %v252 = vrsqrt.pop %v250
      %v253 = vmul.f32 %v250, %v252
      %vm254 = vcmp.eq.f32.partialorder %v250, inf
      %v255 = vsel %vm254, %v250, %v253
      %vm256 = vcmp.eq.f32.partialorder %v250, 0.0
      %v257 = vand.u32 %v250, 2147483648
      %v258 = vsel %vm256, %v257, %v255
      %v259 = vrsqrt.pop %v251
      %v260 = vmul.f32 %v251, %v259
      %vm261 = vcmp.eq.f32.partialorder %v251, inf
      %v262 = vsel %vm261, %v251, %v260
      %vm263 = vcmp.eq.f32.partialorder %v251, 0.0
      %v264 = vand.u32 %v251, 2147483648
      %v265 = vsel %vm263, %v264, %v262
      %v266 = vadd.f32 %v258, 1e-05
      %v267 = vadd.f32 %v265, 1e-05
      %v268 = vrcp.pop %v266
      %v269 = vrcp.pop %v267
      %v270 = vmul.f32 %v216, %v268
      %v271 = vmul.f32 %v217, %v269
      %v272 = vmul.f32 %v218, %v268
      %v273 = vmul.f32 %v219, %v269
      %v274 = vmul.f32 %v220, %v268
      %v275 = vmul.f32 %v221, %v269
      %v276 = vmul.f32 %v222, %v268
      %v277 = vmul.f32 %v223, %v269
      %279 = vset.pattern.permute.xlu0 0
      %280 = vperm.xlu0 %279, %v179
      %v281 = vpop.permute.xlu0 %280
      %284 = vset.pattern.permute.xlu0 0
      %285 = vperm.xlu0 %284, %v180
      %v286 = vpop.permute.xlu0 %285
      %289 = vset.pattern.permute.xlu0 0
      %290 = vperm.xlu0 %289, %v181
      %v291 = vpop.permute.xlu0 %290
      %294 = vset.pattern.permute.xlu0 0
      %295 = vperm.xlu0 %294, %v182
      %v296 = vpop.permute.xlu0 %295
      %v298 = vmul.f32 %v270, %v281
      %v299 = vmul.f32 %v271, %v281
      %v300 = vmul.f32 %v272, %v286
      %v301 = vmul.f32 %v273, %v286
      %v302 = vmul.f32 %v274, %v291
      %v303 = vmul.f32 %v275, %v291
      %v304 = vmul.f32 %v276, %v296
      %v305 = vmul.f32 %v277, %v296
      %307 = vset.pattern.permute.xlu0 0
      %308 = vperm.xlu0 %307, %v183
      %v309 = vpop.permute.xlu0 %308
      %312 = vset.pattern.permute.xlu0 0
      %313 = vperm.xlu0 %312, %v184
      %v314 = vpop.permute.xlu0 %313
      %317 = vset.pattern.permute.xlu0 0
      %318 = vperm.xlu0 %317, %v185
      %v319 = vpop.permute.xlu0 %318
      %322 = vset.pattern.permute.xlu0 0
      %323 = vperm.xlu0 %322, %v186
      %v324 = vpop.permute.xlu0 %323
      %v326 = vadd.f32 %v298, %v309
      %v327 = vadd.f32 %v299, %v309
      %v328 = vadd.f32 %v300, %v314
      %v329 = vadd.f32 %v301, %v314
      %v330 = vadd.f32 %v302, %v319
      %v331 = vadd.f32 %v303, %v319
      %v332 = vadd.f32 %v304, %v324
      %v333 = vadd.f32 %v305, %v324
      %334 = vst [vmem:[%s177] sm:$0xff] %v326
      %335 = vst [vmem:[%s177 + $0x8] sm:$0xff] %v327
      %336 = vst [vmem:[%s177 + $0x10] sm:$0xff] %v328
      %337 = vst [vmem:[%s177 + $0x18] sm:$0xff] %v329
      %338 = vst [vmem:[%s177 + $0x20] sm:$0xff] %v330
      %339 = vst [vmem:[%s177 + $0x28] sm:$0xff] %v331
      %340 = vst [vmem:[%s177 + $0x30] sm:$0xff] %v332
      %341 = vst [vmem:[%s177 + $0x38] sm:$0xff] %v333
      %s342 = scalar_lea.vmem %s170, 64
      %v343 = vld [vmem:[%s342] sm:$0xff]
      %v344 = vld [vmem:[%s342 + $0x8] sm:$0xff]
      %v345 = vld [vmem:[%s342 + $0x10] sm:$0xff]
      %v346 = vld [vmem:[%s342 + $0x18] sm:$0xff]
      %v347 = vld [vmem:[%s342 + $0x20] sm:$0xff]
      %v348 = vld [vmem:[%s342 + $0x28] sm:$0xff]
      %v349 = vld [vmem:[%s342 + $0x30] sm:$0xff]
      %v350 = vld [vmem:[%s342 + $0x38] sm:$0xff]
      %v351 = vadd.f32 %v343, %v345
      %v352 = vadd.f32 %v351, %v347
      %v353 = vadd.f32 %v352, %v349
      %v354 = vrot.slane %v353, 4
      %v355 = vadd.f32 %v353, %v354
      %v356 = vrot.slane %v355, 2
      %v357 = vadd.f32 %v355, %v356
      %v358 = vrot.slane %v357, 1
      %v359 = vadd.f32 %v357, %v358
      %v360 = vadd.f32 %v344, %v346
      %v361 = vadd.f32 %v360, %v348
      %v362 = vadd.f32 %v361, %v350
      %v363 = vrot.slane %v362, 4
      %v364 = vadd.f32 %v362, %v363
      %v365 = vrot.slane %v364, 2
      %v366 = vadd.f32 %v364, %v365
      %v367 = vrot.slane %v366, 1
      %v368 = vadd.f32 %v366, %v367
      %v369 = vmul.f32 %v359, %v213
      %v370 = vmul.f32 %v368, %v213
      %v371 = vsub.f32 %v343, %v369
      %v372 = vsub.f32 %v344, %v370
      %v373 = vsub.f32 %v345, %v369
      %v374 = vsub.f32 %v346, %v370
      %v375 = vsub.f32 %v347, %v369
      %v376 = vsub.f32 %v348, %v370
      %v377 = vsub.f32 %v349, %v369
      %v378 = vsub.f32 %v350, %v370
      %v379 = vmul.f32 %v371, %v371
      %v380 = vmul.f32 %v372, %v372
      %v381 = vmul.f32 %v373, %v373
      %v382 = vmul.f32 %v374, %v374
      %v383 = vmul.f32 %v375, %v375
      %v384 = vmul.f32 %v376, %v376
      %v385 = vmul.f32 %v377, %v377
      %v386 = vmul.f32 %v378, %v378
      %v387 = vadd.f32 %v379, %v381
      %v388 = vadd.f32 %v387, %v383
      %v389 = vadd.f32 %v388, %v385
      %v390 = vrot.slane %v389, 4
      %v391 = vadd.f32 %v389, %v390
      %v392 = vrot.slane %v391, 2
      %v393 = vadd.f32 %v391, %v392
      %v394 = vrot.slane %v393, 1
      %v395 = vadd.f32 %v393, %v394
      %v396 = vadd.f32 %v380, %v382
      %v397 = vadd.f32 %v396, %v384
      %v398 = vadd.f32 %v397, %v386
      %v399 = vrot.slane %v398, 4
      %v400 = vadd.f32 %v398, %v399
      %v401 = vrot.slane %v400, 2
      %v402 = vadd.f32 %v400, %v401
      %v403 = vrot.slane %v402, 1
      %v404 = vadd.f32 %v402, %v403
      %v405 = vmul.f32 %v395, %v213
      %v406 = vmul.f32 %v404, %v213
      %v407 = vrsqrt.pop %v405
      %v408 = vmul.f32 %v405, %v407
      %vm409 = vcmp.eq.f32.partialorder %v405, inf
      %v410 = vsel %vm409, %v405, %v408
      %vm411 = vcmp.eq.f32.partialorder %v405, 0.0
      %v412 = vand.u32 %v405, 2147483648
      %v413 = vsel %vm411, %v412, %v410
      %v414 = vrsqrt.pop %v406
      %v415 = vmul.f32 %v406, %v414
      %vm416 = vcmp.eq.f32.partialorder %v406, inf
      %v417 = vsel %vm416, %v406, %v415
      %vm418 = vcmp.eq.f32.partialorder %v406, 0.0
      %v419 = vand.u32 %v406, 2147483648
      %v420 = vsel %vm418, %v419, %v417
      %v421 = vadd.f32 %v413, 1e-05
      %v422 = vadd.f32 %v420, 1e-05
      %v423 = vrcp.pop %v421
      %v424 = vrcp.pop %v422
      %v425 = vmul.f32 %v371, %v423
      %v426 = vmul.f32 %v372, %v424
      %v427 = vmul.f32 %v373, %v423
      %v428 = vmul.f32 %v374, %v424
      %v429 = vmul.f32 %v375, %v423
      %v430 = vmul.f32 %v376, %v424
      %v431 = vmul.f32 %v377, %v423
      %v432 = vmul.f32 %v378, %v424
      %v433 = vmul.f32 %v425, %v281
      %v434 = vmul.f32 %v426, %v281
      %v435 = vmul.f32 %v427, %v286
      %v436 = vmul.f32 %v428, %v286
      %v437 = vmul.f32 %v429, %v291
      %v438 = vmul.f32 %v430, %v291
      %v439 = vmul.f32 %v431, %v296
      %v440 = vmul.f32 %v432, %v296
      %v441 = vadd.f32 %v433, %v309
      %v442 = vadd.f32 %v434, %v309
      %v443 = vadd.f32 %v435, %v314
      %v444 = vadd.f32 %v436, %v314
      %v445 = vadd.f32 %v437, %v319
      %v446 = vadd.f32 %v438, %v319
      %v447 = vadd.f32 %v439, %v324
      %v448 = vadd.f32 %v440, %v324
      %s449 = scalar_lea.vmem %s177, 64
      %450 = vst [vmem:[%s449] sm:$0xff] %v441
      %451 = vst [vmem:[%s449 + $0x8] sm:$0xff] %v442
      %452 = vst [vmem:[%s449 + $0x10] sm:$0xff] %v443
      %453 = vst [vmem:[%s449 + $0x18] sm:$0xff] %v444
      %454 = vst [vmem:[%s449 + $0x20] sm:$0xff] %v445
      %455 = vst [vmem:[%s449 + $0x28] sm:$0xff] %v446
      %456 = vst [vmem:[%s449 + $0x30] sm:$0xff] %v447
      %457 = vst [vmem:[%s449 + $0x38] sm:$0xff] %v448
      %s458 = smul.u32 2, %s14
      %p459 = scmp.lt.s32.totalorder %s458, 3
      %s460 = scalar_select %p459, %s458, 3
      %s461 = smul.addr %s460, 8
      %s462 = smul.addr %s461, 8
      %s463 = scalar_lea.vmem %s3, %s462
      // Predicated region
      $region33: #{_lambda_.1} parent=31 // pred_check
        %p464 = pneg %p100
      $region34: #{_lambda_.1} parent=31 // pred_check_branch
        %466 = sbr.rel (%p464) target = $region36
      $region35: #{_lambda_.1} parent=31 // pred_region
        %s467 = smul.u32 2, %s14
      $region36: #{_lambda_.1} parent=31 // pred_fallthru
        _
    $region32: #{_lambda_.1} parent=5 // pred_fallthru
      _
    %p468 = scmp.le.s32.totalorder 2, %s9
    // Predicated region
    $region37: #{_lambda_.1} parent=5 // pred_check
      %p469 = pneg %p468
    $region38: #{_lambda_.1} parent=5 // pred_check_branch
      %471 = sbr.rel (%p469) target = $region40
    $region39: #{_lambda_.1} parent=5 // pred_region
      %s472 = ssub.s32 %s9, 2
      // Predicated region
      $region41: #{_lambda_.1} parent=39 // pred_check
        %p473 = pneg %p106
      $region42: #{_lambda_.1} parent=39 // pred_check_branch
        %475 = sbr.rel (%p473) target = $region44
      $region43: #{_lambda_.1} parent=39 // pred_region
        %s476 = smul.u32 2, %s15
        %p477 = scmp.lt.s32.totalorder %s476, 3
        %s478 = scalar_select %p477, %s476, 3
        %s479 = smul.addr %s478, 8
        %s480 = smul.addr %s479, 8
        %s481 = scalar_lea.vmem %s3, %s480
      $region44: #{_lambda_.1} parent=39 // pred_fallthru
        _
    $region40: #{_lambda_.1} parent=5 // pred_fallthru
      _
  $region6: #{_lambda_.1} parent=0 // loop_footer
    %s13 = sadd.s32 1, %s9
  $region7: #{_lambda_.1} parent=0 // loop_footer_branch
    %8 = sbr.rel target = $region3
  $region8: #{_lambda_.1} parent=0 // loop_exit
    _

</llo_original>
